<compile_context>
chip_gen: v6e
topology: v6e:2x2x1
jax: 0.10.0
libtpu: 0.0.40
codegen_flags: <defaults>
</compile_context>

<pallas_src>
import functools

import jax
import jax.numpy as jnp
from jax import lax
from jax.experimental import pallas as pl
from jax.experimental.pallas import tpu as pltpu


def _cdiv(a, b):
    return (a + b - 1) // b


def _round_up(x, m):
    return _cdiv(x, m) * m


def _bert_output_kernel(x_ref, w_ref, r_ref, p_ref, o_ref, acc_ref, *, eps):
    """One (tm, H) output tile: y = LayerNorm(x @ W + bias + residual).

    x_ref:   (tm, tk)  activation rows, K-slice of the intermediate dim
    w_ref:   (tk, H)   weight slice (full weight when the K grid has 1 step)
    r_ref:   (tm, H)   residual rows
    p_ref:   (3, H)    packed [bias; gamma; beta], f32
    o_ref:   (tm, H)   output tile
    acc_ref: (tm, H)   f32 accumulator scratch
    """
    k = pl.program_id(1)

    @pl.when(k == 0)
    def _init():
        acc_ref[...] = jnp.zeros_like(acc_ref)

    acc_ref[...] += jnp.dot(
        x_ref[...], w_ref[...], preferred_element_type=jnp.float32
    )

    @pl.when(k == pl.num_programs(1) - 1)
    def _epilogue():
        # TODO(synk): dropout omitted (inference / p == 0); a training-mode
        # version would mask here with pltpu.prng_seed / pltpu.prng_random_bits.
        bias = p_ref[0:1, :]
        gamma = p_ref[1:2, :]
        beta = p_ref[2:3, :]
        y = acc_ref[...] + bias + r_ref[...].astype(jnp.float32)
        mean = jnp.mean(y, axis=-1, keepdims=True)
        centered = y - mean
        var = jnp.mean(centered * centered, axis=-1, keepdims=True)
        inv = lax.rsqrt(var + jnp.float32(eps))
        o_ref[...] = (centered * inv * gamma + beta).astype(o_ref.dtype)


def bert_output(hidden_states, input_tensor, weight, bias, gamma, beta,
                *, eps=1e-12, tm=512, vmem_budget_bytes=32 * 1024 * 1024):
    """Fused BertOutput forward.

    hidden_states: [B, S, I]   (output of BertIntermediate)
    input_tensor:  [B, S, H]   (residual)
    weight:        [I, H]      (transpose of torch nn.Linear weight)
    bias, gamma, beta: [H]
    Returns [B, S, H] in hidden_states.dtype.
    """
    B, S, I = hidden_states.shape
    I_w, H = weight.shape
    assert I == I_w
    assert input_tensor.shape == (B, S, H)

    # Matmul operands must share a dtype (a mixed bf16 x f32 dot silently
    # promotes to the slow f32 MXU path).  Epilogue params are kept in f32.
    x_dtype = hidden_states.dtype
    weight = weight.astype(x_dtype)
    params = jnp.stack([bias, gamma, beta]).astype(jnp.float32)  # (3, H)

    M = B * S
    x2d = hidden_states.reshape(M, I)
    r2d = input_tensor.reshape(M, H)

    x_size = jnp.dtype(x_dtype).itemsize
    w_size = x_size
    r_size = jnp.dtype(input_tensor.dtype).itemsize
    o_size = x_size

    # Sublane alignment for row tiles: 8 (f32), 16 (bf16), 32 (8-bit).
    row_align = 8 * max(1, 4 // x_size)

    # --- K (intermediate dim) tiling: keep the weight resident when it fits.
    weight_budget = vmem_budget_bytes // 2
    if I * H * w_size <= weight_budget or I % 128 != 0:
        tk, num_k = I, 1
    else:
        tk = 128
        for c in range(I // 128, 0, -1):
            cand = 128 * c
            if I % cand == 0 and 2 * cand * H * w_size <= weight_budget:
                tk = cand
                break
        num_k = I // tk

    # --- M (row) tiling.
    tm = max(row_align,
             _round_up(min(int(tm), _round_up(M, row_align)), row_align))
    # Keep >= ~4 grid steps over rows so both v7x TensorCores stay fed.
    tm = min(tm, max(row_align, _round_up(_cdiv(M, 4), row_align)))

    def vmem_estimate(tm_):
        w_bufs = 1 if num_k == 1 else 2
        est = w_bufs * tk * H * w_size           # weight
        est += 2 * tm_ * tk * x_size             # activations (double buffered)
        est += 2 * tm_ * H * r_size              # residual
        est += 2 * tm_ * H * o_size              # output
        est += tm_ * H * 4                       # f32 accumulator scratch
        est += 8 * _round_up(H, 128) * 4         # (3, H) params, sublane-padded
        return est

    est = vmem_estimate(tm)
    while est > vmem_budget_bytes:
        new_tm = max(row_align, _round_up(tm // 2, row_align))
        if new_tm == tm:
            break
        tm = new_tm
        est = vmem_estimate(tm)

    grid = (_cdiv(M, tm), num_k)

    # Explicit scoped-VMEM limit: raises v5e's 16 MiB default, stays well under
    # v7x's 64 MiB physical VMEM.
    vmem_limit = min(48 * 1024 * 1024,
                     max(32 * 1024 * 1024, int(est * 1.3) + (2 << 20)))

    cost = pl.CostEstimate(
        flops=2 * M * I * H + 10 * M * H,
        transcendentals=M,  # one rsqrt per row
        bytes_accessed=(M * I * x_size + I * H * w_size + M * H * r_size
                        + M * H * o_size + 3 * H * 4),
    )

    w_buffering = pl.Buffered(1) if num_k == 1 else pl.Buffered(2)

    out2d = pl.pallas_call(
        functools.partial(_bert_output_kernel, eps=float(eps)),
        out_shape=jax.ShapeDtypeStruct((M, H), x_dtype),
        grid_spec=pltpu.PrefetchScalarGridSpec(
            num_scalar_prefetch=0,
            grid=grid,
            in_specs=[
                # activations: tiled over rows and (optionally) K
                pl.BlockSpec((tm, tk), lambda i, k: (i, k)),
                # weight: resident (single-buffered) when the K grid is 1 step
                pl.BlockSpec((tk, H), lambda i, k: (k, 0),
                             pipeline_mode=w_buffering),
                # residual: tiled over rows
                pl.BlockSpec((tm, H), lambda i, k: (i, 0)),
                # packed bias/gamma/beta: resident, single-buffered
                pl.BlockSpec((3, H), lambda i, k: (0, 0),
                             pipeline_mode=pl.Buffered(1)),
            ],
            out_specs=pl.BlockSpec((tm, H), lambda i, k: (i, 0)),
            scratch_shapes=[pltpu.VMEM((tm, H), jnp.float32)],
        ),
        compiler_params=pltpu.CompilerParams(
            dimension_semantics=("parallel", "arbitrary"),
            vmem_limit_bytes=vmem_limit,
        ),
        cost_estimate=cost,
    )(x2d, weight, r2d, params)

    return out2d.reshape(B, S, H)


def _reference(hidden_states, input_tensor, weight, bias, gamma, beta, eps):
    y = jnp.einsum("bsi,ih->bsh",
                   hidden_states.astype(jnp.float32),
                   weight.astype(jnp.float32)) + bias.astype(jnp.float32)
    y = y + input_tensor.astype(jnp.float32)
    mean = y.mean(-1, keepdims=True)
    var = ((y - mean) ** 2).mean(-1, keepdims=True)
    out = (y - mean) * lax.rsqrt(var + jnp.float32(eps))
    return out * gamma.astype(jnp.float32) + beta.astype(jnp.float32)


if __name__ == "__main__":
    # Small BERT-like config: hidden_size=32, intermediate_size=128,
    # batch=2, seq=8, layer_norm_eps=1e-12.
    B, S, H, I = 2, 8, 32, 128
    eps = 1e-12

    key = jax.random.PRNGKey(0)
    kx, kr, kw, kb, kg, kbt = jax.random.split(key, 6)
    hidden_states = jax.random.normal(kx, (B, S, I), dtype=jnp.float32)
    input_tensor = jax.random.normal(kr, (B, S, H), dtype=jnp.float32)
    weight = jax.random.normal(kw, (I, H), dtype=jnp.float32) * 0.02
    bias = jax.random.normal(kb, (H,), dtype=jnp.float32) * 0.02
    gamma = 1.0 + 0.1 * jax.random.normal(kg, (H,), dtype=jnp.float32)
    beta = 0.1 * jax.random.normal(kbt, (H,), dtype=jnp.float32)

    ref = _reference(hidden_states, input_tensor, weight, bias, gamma, beta, eps)

    # f32 path
    out = bert_output(hidden_states, input_tensor, weight, bias, gamma, beta,
                      eps=eps)
    out = jax.block_until_ready(out)
    assert out.shape == (B, S, H)
    assert jnp.allclose(out, ref.astype(out.dtype), atol=1e-4, rtol=1e-4)

    # bf16 fast path (weight is cast inside the wrapper to match activations).
    out_bf16 = bert_output(hidden_states.astype(jnp.bfloat16),
                           input_tensor.astype(jnp.bfloat16),
                           weight, bias, gamma, beta, eps=eps)
    out_bf16 = jax.block_until_ready(out_bf16)
    out_bf16_f32 = out_bf16.astype(jnp.float32)
    assert out_bf16.shape == (B, S, H)
    assert bool(jnp.isfinite(out_bf16_f32).all())
    assert float(jnp.max(jnp.abs(out_bf16_f32 - ref))) < 0.25

    print("KERNEL_OK")
</pallas_src>

<mosaic_0001>
module attributes {stable_mosaic.version = 11 : i64} {
  func.func @_bert_output_kernel(%arg0: i32, %arg1: i32, %arg2: memref<8x128xf32, #tpu.memory_space<vmem>>, %arg3: memref<128x32xf32, #tpu.memory_space<vmem>>, %arg4: memref<8x32xf32, #tpu.memory_space<vmem>>, %arg5: memref<3x32xf32, #tpu.memory_space<vmem>>, %arg6: memref<8x32xf32, #tpu.memory_space<vmem>>, %arg7: memref<8x32xf32, #tpu.memory_space<vmem>>) attributes {dimension_semantics = [#tpu.dimension_semantics<parallel>, #tpu.dimension_semantics<arbitrary>], iteration_bounds = array<i64: 2, 1>, scalar_prefetch = 0 : i64, scratch_operands = 1 : i64, tpu.core_type = #tpu.core_type<tc>, window_params = [{transform_indices = @transform_0, window_bounds = array<i64: 8, 128>}, {pipeline_mode = #tpu.pipeline_mode<synchronous>, transform_indices = @transform_1, window_bounds = array<i64: 128, 32>}, {transform_indices = @transform_2, window_bounds = array<i64: 8, 32>}, {pipeline_mode = #tpu.pipeline_mode<synchronous>, transform_indices = @transform_3, window_bounds = array<i64: 3, 32>}, {transform_indices = @transform_4, window_bounds = array<i64: 8, 32>}]} {
    %c0_i32 = arith.constant 0 : i32
    %0 = arith.cmpi eq, %arg1, %c0_i32 : i32
    %1 = arith.extui %0 : i1 to i32
    %c0_i32_0 = arith.constant 0 : i32
    %2 = arith.cmpi ne, %1, %c0_i32_0 : i32
    scf.if %2 {
      %cst_10 = arith.constant 0.000000e+00 : f32
      %12 = vector.broadcast %cst_10 : f32 to vector<8x32xf32>
      %c0_11 = arith.constant 0 : index
      %c0_12 = arith.constant 0 : index
      %13 = vector.load %arg7[%c0_11, %c0_12] : memref<8x32xf32, #tpu.memory_space<vmem>>, vector<8x32xf32>
      tpu.vector_store %arg7[%c0_11, %c0_12], %12 {strides = array<i32>} : memref<8x32xf32, #tpu.memory_space<vmem>>, vector<8x32xf32>,
    } else {
    }
    %c0 = arith.constant 0 : index
    %c0_1 = arith.constant 0 : index
    %3 = vector.load %arg7[%c0, %c0_1] : memref<8x32xf32, #tpu.memory_space<vmem>>, vector<8x32xf32>
    %c0_2 = arith.constant 0 : index
    %c0_3 = arith.constant 0 : index
    %4 = vector.load %arg2[%c0_2, %c0_3] : memref<8x128xf32, #tpu.memory_space<vmem>>, vector<8x128xf32>
    %c0_4 = arith.constant 0 : index
    %c0_5 = arith.constant 0 : index
    %5 = vector.load %arg3[%c0_4, %c0_5] : memref<128x32xf32, #tpu.memory_space<vmem>>, vector<128x32xf32>
    %cst = arith.constant dense<0.000000e+00> : vector<8x32xf32>
    %6 = tpu.matmul %4, %5, %cst {dimension_numbers = #tpu.dot_dimension_numbers<[1], [0], [0], [1], [0, 0, 1, 1], [], []>} : vector<8x128xf32>, vector<128x32xf32>, vector<8x32xf32> -> vector<8x32xf32>
    %7 = arith.addf %3, %6 : vector<8x32xf32>
    %c0_6 = arith.constant 0 : index
    %c0_7 = arith.constant 0 : index
    %8 = vector.load %arg7[%c0_6, %c0_7] : memref<8x32xf32, #tpu.memory_space<vmem>>, vector<8x32xf32>
    tpu.vector_store %arg7[%c0_6, %c0_7], %7 {strides = array<i32>} : memref<8x32xf32, #tpu.memory_space<vmem>>, vector<8x32xf32>,
    %c0_i32_8 = arith.constant 0 : i32
    %9 = arith.cmpi eq, %arg1, %c0_i32_8 : i32
    %10 = arith.extui %9 : i1 to i32
    %c0_i32_9 = arith.constant 0 : i32
    %11 = arith.cmpi ne, %10, %c0_i32_9 : i32
    scf.if %11 {
      %c0_10 = arith.constant 0 : index
      %c0_11 = arith.constant 0 : index
      %12 = vector.load %arg5[%c0_10, %c0_11] : memref<3x32xf32, #tpu.memory_space<vmem>>, vector<1x32xf32>
      %c1 = arith.constant 1 : index
      %c0_12 = arith.constant 0 : index
      %13 = vector.load %arg5[%c1, %c0_12] : memref<3x32xf32, #tpu.memory_space<vmem>>, vector<1x32xf32>
      %c2 = arith.constant 2 : index
      %c0_13 = arith.constant 0 : index
      %14 = vector.load %arg5[%c2, %c0_13] : memref<3x32xf32, #tpu.memory_space<vmem>>, vector<1x32xf32>
      %c0_14 = arith.constant 0 : index
      %c0_15 = arith.constant 0 : index
      %15 = vector.load %arg7[%c0_14, %c0_15] : memref<8x32xf32, #tpu.memory_space<vmem>>, vector<8x32xf32>
      %16 = vector.broadcast %12 : vector<1x32xf32> to vector<8x32xf32>
      %17 = arith.addf %15, %16 : vector<8x32xf32>
      %c0_16 = arith.constant 0 : index
      %c0_17 = arith.constant 0 : index
      %18 = vector.load %arg4[%c0_16, %c0_17] : memref<8x32xf32, #tpu.memory_space<vmem>>, vector<8x32xf32>
      %19 = arith.addf %17, %18 : vector<8x32xf32>
      %cst_18 = arith.constant dense<0.000000e+00> : vector<8xf32>
      %20 = vector.multi_reduction <add>, %19, %cst_18 [1] : vector<8x32xf32> to vector<8xf32>
      %21 = vector.shape_cast %20 : vector<8xf32> to vector<8x1xf32>
      %cst_19 = arith.constant 3.200000e+01 : f32
      %22 = vector.broadcast %cst_19 : f32 to vector<8x1xf32>
      %23 = arith.divf %21, %22 : vector<8x1xf32>
      %24 = vector.broadcast %23 : vector<8x1xf32> to vector<8x32xf32>
      %25 = arith.subf %19, %24 : vector<8x32xf32>
      %26 = arith.mulf %25, %25 : vector<8x32xf32>
      %cst_20 = arith.constant dense<0.000000e+00> : vector<8xf32>
      %27 = vector.multi_reduction <add>, %26, %cst_20 [1] : vector<8x32xf32> to vector<8xf32>
      %28 = vector.shape_cast %27 : vector<8xf32> to vector<8x1xf32>
      %cst_21 = arith.constant 3.200000e+01 : f32
      %29 = vector.broadcast %cst_21 : f32 to vector<8x1xf32>
      %30 = arith.divf %28, %29 : vector<8x1xf32>
      %cst_22 = arith.constant 9.99999996E-13 : f32
      %31 = vector.broadcast %cst_22 : f32 to vector<8x1xf32>
      %32 = arith.addf %30, %31 : vector<8x1xf32>
      %33 = math.rsqrt %32 : vector<8x1xf32>
      %34 = vector.broadcast %33 : vector<8x1xf32> to vector<8x32xf32>
      %35 = arith.mulf %25, %34 : vector<8x32xf32>
      %36 = vector.broadcast %13 : vector<1x32xf32> to vector<8x32xf32>
      %37 = arith.mulf %35, %36 : vector<8x32xf32>
      %38 = vector.broadcast %14 : vector<1x32xf32> to vector<8x32xf32>
      %39 = arith.addf %37, %38 : vector<8x32xf32>
      %c0_23 = arith.constant 0 : index
      %c0_24 = arith.constant 0 : index
      %40 = vector.load %arg6[%c0_23, %c0_24] : memref<8x32xf32, #tpu.memory_space<vmem>>, vector<8x32xf32>
      tpu.vector_store %arg6[%c0_23, %c0_24], %39 {strides = array<i32>} : memref<8x32xf32, #tpu.memory_space<vmem>>, vector<8x32xf32>,
    } else {
    }
    return
  }
  func.func @transform_0(%arg0: i32, %arg1: i32) -> (i32, i32) {
    %c0_i32 = arith.constant 0 : i32
    return %arg0, %arg1 : i32, i32
  }
  func.func @transform_1(%arg0: i32, %arg1: i32) -> (i32, i32) {
    %c0_i32 = arith.constant 0 : i32
    %c0_i32_0 = arith.constant 0 : i32
    return %arg1, %c0_i32 : i32, i32
  }
  func.func @transform_2(%arg0: i32, %arg1: i32) -> (i32, i32) {
    %c0_i32 = arith.constant 0 : i32
    %c0_i32_0 = arith.constant 0 : i32
    return %arg0, %c0_i32 : i32, i32
  }
  func.func @transform_3(%arg0: i32, %arg1: i32) -> (i32, i32) {
    %c0_i32 = arith.constant 0 : i32
    %c0_i32_0 = arith.constant 0 : i32
    %c0_i32_1 = arith.constant 0 : i32
    return %c0_i32, %c0_i32_0 : i32, i32
  }
  func.func @transform_4(%arg0: i32, %arg1: i32) -> (i32, i32) {
    %c0_i32 = arith.constant 0 : i32
    %c0_i32_0 = arith.constant 0 : i32
    return %arg0, %c0_i32 : i32, i32
  }
}

</mosaic_0001>

<llo_original>
// kernel: tpu_custom_call.1
$region0: #{tpu_custom_call.1}
  #allocation0 [shape = 'u32[]', space=smem, size = 0x4, offset = 0x4, fixed_abs, tag = 'smem constant byte address 0x4 - core index']
  #allocation1 [shape = 'u32[144,128]{1,0:T(1,128)}', space=vmem, size = 0x12000, scoped, tag = 'internal scratch']
  #allocation2 [shape = 'f32[8,32]{1,0:T(8,128)}', space=vmem, size = 0x1000, scoped, tag = 'scratch operand']
  %s0 = inlined_call_operand.vmem [shape: f32[16,128], index: 0, kind: input, shape index: {}]
  %s1 = inlined_call_operand.vmem [shape: f32[128,32], index: 1, kind: input, shape index: {}]
  %s2 = inlined_call_operand.vmem [shape: f32[16,32], index: 2, kind: input, shape index: {}]
  %s3 = inlined_call_operand.vmem [shape: f32[3,32], index: 3, kind: input, shape index: {}]
  %s4 = inlined_call_operand.hbm [shape: f32[16,32], index: 4, kind: output, shape index: {}]
  %s5 = sld [smem:[#allocation0]]
  $region57: #{tpu_custom_call.1} parent=0
    _
  %s7 = ssub.s32 1, %s5
  %s8 = scalar_select 0, %s7, %s5
  $region1: #{tpu_custom_call.1} parent=0
    #allocation3 [shape = 'u8[8192]{0}', space=vmem, size = 0x2000, scoped, tag = 'output window, operand 0']
    #allocation4 [shape = 's32[2]{0}', space=sflag, size = 0x8, scoped, tag = 'scoped memory for tpu_custom_call.1']
    %9 = vsyncpa [#allocation4], 0
    %s10 = scalar_lea.sflag [#allocation4], 1
    %11 = vsyncpa %s10, 0
    loop: start=0, step=1, limit=4
    $region2: #{tpu_custom_call.1} parent=1 // loop_pre_header
      _
    $region3: #{tpu_custom_call.1} parent=1 // loop_header
      %s13 = sphi 0, %s17
      %p14 = scmp.ge.s32.totalorder %s13, 4
      %s20 = sphi 0, %s32
      %s21 = sphi 0, %s28
      %s22 = sphi 0, %s20
      %s23 = sphi 0, %s21
      %s24 = sphi 0, %s22
      %s25 = sphi 0, %s23
      %s37 = sphi 0, %s39
      %s40 = sphi 0, %s37
      %s41 = sphi 0, %s40
      %s57 = sphi 0, %s41
      %s63 = sphi 0, %s65
      %s66 = sphi 0, %s63
      %s67 = sphi 0, %s66
      %s83 = sphi 0, %s67
      %s89 = sphi 0, %s91
      %s92 = sphi 0, %s89
      %s93 = sphi 0, %s92
      %s109 = sphi 0, %s93
      %s113 = sphi 0, %s113
      %s115 = sphi 0, %s113
      %s116 = sphi 0, %s115
      %s130 = sphi 0, %s116
      %s136 = sphi 0, %s138
      %s139 = sphi 0, %s136
      %s140 = sphi 0, %s139
      %s156 = sphi 0, %s140
    $region4: #{tpu_custom_call.1} parent=1 // loop_header_branch
      %16 = sbr.rel (%p14) target = $region8
    $region5: #{tpu_custom_call.1} parent=1 // loop_body
      %s18 = ssub.s32 %s13, 1
      %s19 = ssub.s32 %s13, 2
      %s26 = sadd.s32 1, %s21
      %p27 = scmp.ge.s32.totalorder %s26, 1
      %s28 = scalar_select %p27, 0, %s26
      %s29 = sadd.s32 1, %s20
      %s30 = scalar_select %p27, %s29, %s20
      %p31 = scmp.ge.s32.totalorder %s30, 2
      %s32 = scalar_select %p31, 0, %s30
      %s33 = ssub.s32 %s20, %s32
      %s34 = ssub.s32 %s21, %s28
      %s35 = sor.u32 %s33, %s34
      %p36 = scmp.eq.s32.totalorder %s35, 0
      %s38 = sadd.s32 %s37, 1
      %s39 = scalar_select %p36, %s37, %s38
      %p42 = pneg %p36
      %p43 = scmp.eq.s32.totalorder %s13, 1
      %p44 = por %p42, %p43
      %p45 = scmp.ne.s32.totalorder %s37, %s40
      %p46 = scmp.eq.s32.totalorder %s13, 0
      %p47 = por %p45, %p46
      %p48 = scmp.ne.s32.totalorder %s37, %s40
      %p49 = scmp.eq.s32.totalorder %s18, 1
      %p50 = por %p48, %p49
      %p51 = scmp.ne.s32.totalorder %s40, %s41
      %p52 = scmp.eq.s32.totalorder %s18, 0
      %p53 = por %p51, %p52
      %p54 = scmp.ne.s32.totalorder %s40, %s41
      %p55 = scmp.eq.s32.totalorder %s19, 1
      %p56 = por %p54, %p55
      %p58 = scmp.ne.s32.totalorder %s41, %s57
      %p59 = scmp.eq.s32.totalorder %s19, 0
      %p60 = por %p58, %p59
      %s61 = ssub.s32 %s21, %s28
      %p62 = scmp.eq.s32.totalorder %s61, 0
      %s64 = sadd.s32 %s63, 1
      %s65 = scalar_select %p62, %s63, %s64
      %p68 = pneg %p62
      %p69 = scmp.eq.s32.totalorder %s13, 1
      %p70 = por %p68, %p69
      %p71 = scmp.ne.s32.totalorder %s63, %s66
      %p72 = scmp.eq.s32.totalorder %s13, 0
      %p73 = por %p71, %p72
      %p74 = scmp.ne.s32.totalorder %s63, %s66
      %p75 = scmp.eq.s32.totalorder %s18, 1
      %p76 = por %p74, %p75
      %p77 = scmp.ne.s32.totalorder %s66, %s67
      %p78 = scmp.eq.s32.totalorder %s18, 0
      %p79 = por %p77, %p78
      %p80 = scmp.ne.s32.totalorder %s66, %s67
      %p81 = scmp.eq.s32.totalorder %s19, 1
      %p82 = por %p80, %p81
      %p84 = scmp.ne.s32.totalorder %s67, %s83
      %p85 = scmp.eq.s32.totalorder %s19, 0
      %p86 = por %p84, %p85
      %s87 = ssub.s32 %s20, %s32
      %p88 = scmp.eq.s32.totalorder %s87, 0
      %s90 = sadd.s32 %s89, 1
      %s91 = scalar_select %p88, %s89, %s90
      %p94 = pneg %p88
      %p95 = scmp.eq.s32.totalorder %s13, 1
      %p96 = por %p94, %p95
      %p97 = scmp.ne.s32.totalorder %s89, %s92
      %p98 = scmp.eq.s32.totalorder %s13, 0
      %p99 = por %p97, %p98
      %p100 = scmp.ne.s32.totalorder %s89, %s92
      %p101 = scmp.eq.s32.totalorder %s18, 1
      %p102 = por %p100, %p101
      %p103 = scmp.ne.s32.totalorder %s92, %s93
      %p104 = scmp.eq.s32.totalorder %s18, 0
      %p105 = por %p103, %p104
      %p106 = scmp.ne.s32.totalorder %s92, %s93
      %p107 = scmp.eq.s32.totalorder %s19, 1
      %p108 = por %p106, %p107
      %p110 = scmp.ne.s32.totalorder %s93, %s109
      %p111 = scmp.eq.s32.totalorder %s19, 0
      %p112 = por %p110, %p111
      %s114 = sadd.s32 %s113, 1
      %p117 = scmp.eq.s32.totalorder %s13, 1
      %p118 = scmp.ne.s32.totalorder %s113, %s115
      %p119 = scmp.eq.s32.totalorder %s13, 0
      %p120 = por %p118, %p119
      %p121 = scmp.ne.s32.totalorder %s113, %s115
      %p122 = scmp.eq.s32.totalorder %s18, 1
      %p123 = por %p121, %p122
      %p124 = scmp.ne.s32.totalorder %s115, %s116
      %p125 = scmp.eq.s32.totalorder %s18, 0
      %p126 = por %p124, %p125
      %p127 = scmp.ne.s32.totalorder %s115, %s116
      %p128 = scmp.eq.s32.totalorder %s19, 1
      %p129 = por %p127, %p128
      %p131 = scmp.ne.s32.totalorder %s116, %s130
      %p132 = scmp.eq.s32.totalorder %s19, 0
      %p133 = por %p131, %p132
      %s134 = ssub.s32 %s20, %s32
      %p135 = scmp.eq.s32.totalorder %s134, 0
      %s137 = sadd.s32 %s136, 1
      %s138 = scalar_select %p135, %s136, %s137
      %p141 = pneg %p135
      %p142 = scmp.eq.s32.totalorder %s13, 1
      %p143 = por %p141, %p142
      %p144 = scmp.ne.s32.totalorder %s136, %s139
      %p145 = scmp.eq.s32.totalorder %s13, 0
      %p146 = por %p144, %p145
      %p147 = scmp.ne.s32.totalorder %s136, %s139
      %p148 = scmp.eq.s32.totalorder %s18, 1
      %p149 = por %p147, %p148
      %p150 = scmp.ne.s32.totalorder %s139, %s140
      %p151 = scmp.eq.s32.totalorder %s18, 0
      %p152 = por %p150, %p151
      %p153 = scmp.ne.s32.totalorder %s139, %s140
      %p154 = scmp.eq.s32.totalorder %s19, 1
      %p155 = por %p153, %p154
      %p157 = scmp.ne.s32.totalorder %s140, %s156
      %p158 = scmp.eq.s32.totalorder %s19, 0
      %p159 = por %p157, %p158
      %p160 = scmp.le.s32.totalorder 1, %s13
      %p161 = scmp.lt.s32.totalorder %s13, 3
      %p162 = pnand %p160, %p161
      %p163 = pneg %p162
      // Predicated region
      $region9: #{tpu_custom_call.1} parent=5 // pred_check
        _
      $region10: #{tpu_custom_call.1} parent=5 // pred_check_branch
        %165 = sbr.rel (%p162) target = $region12
      $region11: #{tpu_custom_call.1} parent=5 // pred_region
        %s166 = ssub.s32 %s13, 1
        // Predicated region
        $region13: #{tpu_custom_call.1} parent=11 // pred_check
          %p167 = pneg %p79
        $region14: #{tpu_custom_call.1} parent=11 // pred_check_branch
          %169 = sbr.rel (%p167) target = $region16
        $region15: #{tpu_custom_call.1} parent=11 // pred_region
          %s170 = smul.u32 16, %s23
          %p171 = scmp.lt.s32.totalorder %s170, 15
          %s172 = scalar_select %p171, %s170, 15
          %s173 = smul.addr %s172, 8
          %s174 = scalar_lea.vmem %s1, %s173
          %s175 = smul.u32 16, %s23
        $region16: #{tpu_custom_call.1} parent=11 // pred_fallthru
          _
        // Predicated region
        $region17: #{tpu_custom_call.1} parent=11 // pred_check
          %p176 = pneg %p126
        $region18: #{tpu_custom_call.1} parent=11 // pred_check_branch
          %178 = sbr.rel (%p176) target = $region20
        $region19: #{tpu_custom_call.1} parent=11 // pred_region
          _
        $region20: #{tpu_custom_call.1} parent=11 // pred_fallthru
          _
      $region12: #{tpu_custom_call.1} parent=5 // pred_fallthru
        _
      %p179 = scmp.lt.s32.totalorder %s13, 2
      // Predicated region
      $region21: #{tpu_custom_call.1} parent=5 // pred_check
        %p180 = pneg %p179
      $region22: #{tpu_custom_call.1} parent=5 // pred_check_branch
        %182 = sbr.rel (%p180) target = $region24
      $region23: #{tpu_custom_call.1} parent=5 // pred_region
        // Predicated region
        $region25: #{tpu_custom_call.1} parent=23 // pred_check
          %p183 = pneg %p47
        $region26: #{tpu_custom_call.1} parent=23 // pred_check_branch
          %185 = sbr.rel (%p183) target = $region28
        $region27: #{tpu_custom_call.1} parent=23 // pred_region
          %p186 = scmp.lt.s32.totalorder %s20, 1
          %s187 = scalar_select %p186, %s20, 1
          %p188 = scmp.lt.s32.totalorder %s21, 0
          %s189 = scalar_select %p188, %s21, 0
          %s190 = sadd.s32 %s189, %s187
          %s191 = smul.addr %s190, 8
          %s192 = scalar_lea.vmem %s0, %s191
        $region28: #{tpu_custom_call.1} parent=23 // pred_fallthru
          _
        // Predicated region
        $region29: #{tpu_custom_call.1} parent=23 // pred_check
          %p193 = pneg %p99
        $region30: #{tpu_custom_call.1} parent=23 // pred_check_branch
          %195 = sbr.rel (%p193) target = $region32
        $region31: #{tpu_custom_call.1} parent=23 // pred_region
          %p196 = scmp.lt.s32.totalorder %s20, 1
          %s197 = scalar_select %p196, %s20, 1
          %s198 = smul.addr %s197, 8
          %s199 = scalar_lea.vmem %s2, %s198
        $region32: #{tpu_custom_call.1} parent=23 // pred_fallthru
          _
      $region24: #{tpu_custom_call.1} parent=5 // pred_fallthru
        _
      %p200 = scmp.le.s32.totalorder 1, %s13
      %p201 = scmp.lt.s32.totalorder %s13, 3
      %p202 = pnand %p200, %p201
      %p203 = pneg %p202
      // Predicated region
      $region33: #{tpu_custom_call.1} parent=5 // pred_check
        _
      $region34: #{tpu_custom_call.1} parent=5 // pred_check_branch
        %205 = sbr.rel (%p202) target = $region36
      $region35: #{tpu_custom_call.1} parent=5 // pred_region
        %s206 = ssub.s32 %s13, 1
        %p207 = scmp.lt.s32.totalorder %s22, 1
        %s208 = scalar_select %p207, %s22, 1
        %p209 = scmp.lt.s32.totalorder %s23, 0
        %s210 = scalar_select %p209, %s23, 0
        %s211 = sadd.s32 %s210, %s208
        %s212 = smul.addr %s211, 8
        %s213 = scalar_lea.vmem %s0, %s212
        %p214 = pneg %p53
        %p215 = pneg %p50
        %s216 = smul.u32 16, %s23
        %p217 = scmp.lt.s32.totalorder %s216, 15
        %s218 = scalar_select %p217, %s216, 15
        %s219 = smul.addr %s218, 8
        %s220 = scalar_lea.vmem %s1, %s219
        %p221 = pneg %p79
        %p222 = pneg %p76
        %p223 = scmp.lt.s32.totalorder %s22, 1
        %s224 = scalar_select %p223, %s22, 1
        %s225 = smul.addr %s224, 8
        %s226 = scalar_lea.vmem %s2, %s225
        %p227 = pneg %p105
        %p228 = pneg %p102
        %p229 = pneg %p126
        %p230 = pneg %p123
        %p231 = pneg %p152
        %p232 = pneg %p149
        %s233 = sand.u32 %s139, 1
        %s234 = scalar_lea.sflag [#allocation4], %s233
        %s235 = sand.u32 %s139, 1
        %s236 = smul.addr %s235, 8
        %s237 = scalar_lea.vmem [#allocation3], %s236
        %p238 = scmp.lt.s32.totalorder %s22, 1
        %s239 = scalar_select %p238, %s22, 1
        %p240 = scmp.lt.s32.totalorder %s23, 0
        %s241 = scalar_select %p240, %s23, 0
        %s242 = sadd.s32 %s241, %s239
        %s243 = smul.addr %s242, 8
        %s244 = scalar_lea.vmem %s0, %s243
        %s245 = smul.u32 16, %s23
        %p246 = scmp.lt.s32.totalorder %s245, 15
        %s247 = scalar_select %p246, %s245, 15
        %s248 = smul.addr %s247, 8
        %s249 = scalar_lea.vmem %s1, %s248
        %s250 = smul.u32 16, %s23
        %p251 = scmp.lt.s32.totalorder %s22, 1
        %s252 = scalar_select %p251, %s22, 1
        %s253 = smul.addr %s252, 8
        %s254 = scalar_lea.vmem %s2, %s253
        %p255 = scmp.eq.s32.totalorder %s23, 0
        // Predicated region
        $region37: #{tpu_custom_call.1} parent=35 // pred_check
          %p256 = pneg %p255
        $region38: #{tpu_custom_call.1} parent=35 // pred_check_branch
          %258 = sbr.rel (%p256) target = $region40
        $region39: #{tpu_custom_call.1} parent=35 // pred_region
          %vm259 = vcmask 261120
          %260 = vst.msk [vmem:[#allocation2] sm:$0xff] %vm259, 0.0
        $region40: #{tpu_custom_call.1} parent=35 // pred_fallthru
          _
        %v261 = vld [vmem:[#allocation2] sm:$0xff]
        %v262 = vld [vmem:[%s244] sm:$0xff]
        %v263 = vld [vmem:[%s249] sm:$0xff]
        %v264 = vld [vmem:[%s249 + $0x8] sm:$0xff]
        %v265 = vld [vmem:[%s249 + $0x10] sm:$0xff]
        %v266 = vld [vmem:[%s249 + $0x18] sm:$0xff]
        %v267 = vld [vmem:[%s249 + $0x20] sm:$0xff]
        %v268 = vld [vmem:[%s249 + $0x28] sm:$0xff]
        %v269 = vld [vmem:[%s249 + $0x30] sm:$0xff]
        %v270 = vld [vmem:[%s249 + $0x38] sm:$0xff]
        %v271 = vld [vmem:[%s249 + $0x40] sm:$0xff]
        %v272 = vld [vmem:[%s249 + $0x48] sm:$0xff]
        %v273 = vld [vmem:[%s249 + $0x50] sm:$0xff]
        %v274 = vld [vmem:[%s249 + $0x58] sm:$0xff]
        %v275 = vld [vmem:[%s249 + $0x60] sm:$0xff]
        %v276 = vld [vmem:[%s249 + $0x68] sm:$0xff]
        %v277 = vld [vmem:[%s249 + $0x70] sm:$0xff]
        %v278 = vld [vmem:[%s249 + $0x78] sm:$0xff]
        %279 = vmatprep.subr.mxu0 0.0
        %280 = vmatpush1.msra.mxu0 %v278
        %281 = vmatprep.subr.mxu0 0.0
        %282 = vmatpush1.msra.mxu0 %v277
        %283 = vmatprep.subr.mxu0 0.0
        %284 = vmatpush1.msra.mxu0 %v276
        %285 = vmatprep.subr.mxu0 0.0
        %286 = vmatpush1.msra.mxu0 %v275
        %287 = vmatprep.subr.mxu0 0.0
        %288 = vmatpush1.msra.mxu0 %v274
        %289 = vmatprep.subr.mxu0 0.0
        %290 = vmatpush1.msra.mxu0 %v273
        %291 = vmatprep.subr.mxu0 0.0
        %292 = vmatpush1.msra.mxu0 %v272
        %293 = vmatprep.subr.mxu0 0.0
        %294 = vmatpush1.msra.mxu0 %v271
        %295 = vmatprep.subr.mxu0 0.0
        %296 = vmatpush1.msra.mxu0 %v270
        %297 = vmatprep.subr.mxu0 0.0
        %298 = vmatpush1.msra.mxu0 %v269
        %299 = vmatprep.subr.mxu0 0.0
        %300 = vmatpush1.msra.mxu0 %v268
        %301 = vmatprep.subr.mxu0 0.0
        %302 = vmatpush1.msra.mxu0 %v267
        %303 = vmatprep.subr.mxu0 0.0
        %304 = vmatpush1.msra.mxu0 %v266
        %305 = vmatprep.subr.mxu0 0.0
        %306 = vmatpush1.msra.mxu0 %v265
        %307 = vmatprep.subr.mxu0 0.0
        %308 = vmatpush1.msra.mxu0 %v264
        %309 = vmatprep.subr.mxu0 0.0
        %310 = vmatpush1.msra.mxu0 %v263
        %311 = vmatprep.subr.mxu0 0.0
        %312 = vmatpush2.msra.mxu0 0.0
        %313 = vmatprep.subr.mxu0 0.0
        %314 = vmatpush2.msra.mxu0 0.0
        %315 = vmatprep.subr.mxu0 0.0
        %316 = vmatpush2.msra.mxu0 0.0
        %317 = vmatprep.subr.mxu0 0.0
        %318 = vmatpush2.msra.mxu0 0.0
        %319 = vmatprep.subr.mxu0 0.0
        %320 = vmatpush2.msra.mxu0 0.0
        %321 = vmatprep.subr.mxu0 0.0
        %322 = vmatpush2.msra.mxu0 0.0
        %323 = vmatprep.subr.mxu0 0.0
        %324 = vmatpush2.msra.mxu0 0.0
        %325 = vmatprep.subr.mxu0 0.0
        %326 = vmatpush2.msra.mxu0 0.0
        %327 = vmatprep.subr.mxu0 0.0
        %328 = vmatpush2.msra.mxu0 0.0
        %329 = vmatprep.subr.mxu0 0.0
        %330 = vmatpush2.msra.mxu0 0.0
        %331 = vmatprep.subr.mxu0 0.0
        %332 = vmatpush2.msra.mxu0 0.0
        %333 = vmatprep.subr.mxu0 0.0
        %334 = vmatpush2.msra.mxu0 0.0
        %335 = vmatprep.subr.mxu0 0.0
        %336 = vmatpush2.msra.mxu0 0.0
        %337 = vmatprep.subr.mxu0 0.0
        %338 = vmatpush2.msra.mxu0 0.0
        %339 = vmatprep.subr.mxu0 0.0
        %340 = vmatpush2.msra.mxu0 0.0
        %341 = vmatprep.subr.mxu0 0.0
        %342 = vmatpush2.msra.mxu0 0.0
        %343 = vmatprep.mubr.f32.mxu0 0.0
        %344 = vmatmul.mubr.f32.gmra.mxu0 %v262
        %v345 = vpop.f32.mrf.mxu0
        %v346 = vadd.f32 0.0, %v345
        %v347 = vpop.f32.mrf.mxu0
        %348 = vdwg.mxu0
        %v349 = vadd.f32 %v261, %v346
        %vm350 = vcmask 261120
        %351 = vst.msk [vmem:[#allocation2] sm:$0xff] %vm350, %v349
        // Predicated region
        $region41: #{tpu_custom_call.1} parent=35 // pred_check
          %p352 = pneg %p255
        $region42: #{tpu_custom_call.1} parent=35 // pred_check_branch
          %354 = sbr.rel (%p352) target = $region44
        $region43: #{tpu_custom_call.1} parent=35 // pred_region
          %v355 = vld [vmem:[%s3] sm:$0x1]
          %v356 = vld [vmem:[%s3 + $0x1] sm:$0x1]
          %v357 = vld [vmem:[%s3 + $0x2] sm:$0x1]
          %v358 = vld [vmem:[#allocation2] sm:$0xff]
          %v359 = vlaneseq
          %v360 = vshrl.u32 %v359, 7
          %v361 = vsub.s32 0, %v360
          %v362 = vrot.slane %v355, %v361
          %v363 = vadd.f32 %v358, %v362
          %v364 = vld [vmem:[%s254] sm:$0xff]
          %v365 = vadd.f32 %v363, %v364
          %v366 = vsel %vm350, %v365, 0.0
          %367 = vadd.xlane.f32.xlu0 %v366
          %v368 = vpop.xlane.xlu0 %367
          %v369 = vrcp.pop 32.0
          %v370 = vmul.f32 %v368, %v369
          %v371 = vsub.f32 %v365, %v370
          %v372 = vmul.f32 %v371, %v371
          %v373 = vsel %vm350, %v372, 0.0
          %374 = vadd.xlane.f32.xlu0 %v373
          %v375 = vpop.xlane.xlu0 %374
          %v376 = vmul.f32 %v375, %v369
          %v377 = vadd.f32 %v376, 1e-12
          %v378 = vrsqrt.pop %v377
          %v379 = vmul.f32 %v371, %v378
          %v380 = vlaneseq
          %v381 = vshrl.u32 %v380, 7
          %v382 = vsub.s32 0, %v381
          %v383 = vrot.slane %v356, %v382
          %v384 = vmul.f32 %v379, %v383
          %v385 = vlaneseq
          %v386 = vshrl.u32 %v385, 7
          %v387 = vsub.s32 0, %v386
          %v388 = vrot.slane %v357, %v387
          %v389 = vadd.f32 %v384, %v388
          %390 = vst.msk [vmem:[%s237] sm:$0xff] %vm350, %v389
        $region44: #{tpu_custom_call.1} parent=35 // pred_fallthru
          _
        %s391 = sand.u32 %s139, 1
        %s392 = scalar_lea.sflag [#allocation4], %s391
        %s393 = sand.u32 %s139, 1
        %s394 = smul.addr %s393, 8
        %s395 = scalar_lea.vmem [#allocation3], %s394
        // Predicated region
        $region45: #{tpu_custom_call.1} parent=35 // pred_check
          %p396 = pneg %p149
        $region46: #{tpu_custom_call.1} parent=35 // pred_check_branch
          %398 = sbr.rel (%p396) target = $region48
        $region47: #{tpu_custom_call.1} parent=35 // pred_region
          %s400 = ssub.s32 128, 128
          %401 = vsyncadd %s392, %s400
          %s402 = smul.addr %s22, 128
          %s403 = scalar_lea.hbm %s4, %s402
          %s405 = sshll.u32 %s395, 4
          %s406 = int_to_ptr.vmem [resolvable:$true] %s405
          %408 = dma.vmem_to_hbm [thread:$0]  %s406, 128, %s403, %s392
        $region48: #{tpu_custom_call.1} parent=35 // pred_fallthru
          _
      $region36: #{tpu_custom_call.1} parent=5 // pred_fallthru
        _
      %p409 = scmp.le.s32.totalorder 2, %s13
      // Predicated region
      $region49: #{tpu_custom_call.1} parent=5 // pred_check
        %p410 = pneg %p409
      $region50: #{tpu_custom_call.1} parent=5 // pred_check_branch
        %412 = sbr.rel (%p410) target = $region52
      $region51: #{tpu_custom_call.1} parent=5 // pred_region
        %s413 = ssub.s32 %s13, 2
        // Predicated region
        $region53: #{tpu_custom_call.1} parent=51 // pred_check
          %p414 = pneg %p155
        $region54: #{tpu_custom_call.1} parent=51 // pred_check_branch
          %416 = sbr.rel (%p414) target = $region56
        $region55: #{tpu_custom_call.1} parent=51 // pred_region
          %s417 = sand.u32 %s140, 1
          %s418 = scalar_lea.sflag [#allocation4], %s417
          %s419 = sand.u32 %s140, 1
          %s420 = smul.addr %s419, 8
          %s421 = scalar_lea.vmem [#allocation3], %s420
          %422 = dma.done %s418, 128
        $region56: #{tpu_custom_call.1} parent=51 // pred_fallthru
          _
      $region52: #{tpu_custom_call.1} parent=5 // pred_fallthru
        _
    $region6: #{tpu_custom_call.1} parent=1 // loop_footer
      %s17 = sadd.s32 1, %s13
    $region7: #{tpu_custom_call.1} parent=1 // loop_footer_branch
      %12 = sbr.rel target = $region3
    $region8: #{tpu_custom_call.1} parent=1 // loop_exit
      _
    %423 = vsyncpa [#allocation4], 1
    %s424 = scalar_lea.sflag [#allocation4], 1
    %425 = vsyncpa %s424, 1

</llo_original>
